<compile_context>
chip_gen: v6e
topology: v6e:2x2x1
jax: 0.10.0
libtpu: 0.0.40
codegen_flags: <defaults>
</compile_context>

<pallas_src>
import functools

import jax
import jax.numpy as jnp
from jax import lax
from jax.experimental import pallas as pl
from jax.experimental.pallas import tpu as pltpu


def _round_up(n, m):
    return ((n + m - 1) // m) * m


def _pick_row_tile(n):
    for c in (512, 256, 128, 64, 32, 16, 8):
        if n >= c and n % c == 0:
            return c
    return n


def _biaffine_kernel(x_ref, y_ref, w_ref, o_ref, *, n_out, dpy):
    # x_ref: (1, TLx, Dpx)   y_ref: (1, Ly, Dpy)   w_ref: (Dpx, n_out*Dpy)
    # o_ref: (1, n_out, TLx, Ly)
    x = x_ref[0]                                      # (TLx, Dpx)
    y = y_ref[0]                                      # (Ly,  Dpy)
    # One big MXU matmul: xw[i, o*Dpy + q] = sum_p x[i, p] * W[o, p, q]
    xw = jnp.dot(x, w_ref[...], preferred_element_type=jnp.float32)
    for o in range(n_out):                            # n_out is small & static
        xw_o = xw[:, o * dpy:(o + 1) * dpy]           # 128-aligned static slice
        s = lax.dot_general(xw_o, y, (((1,), (1,)), ((), ())),
                            preferred_element_type=jnp.float32)   # (TLx, Ly)
        o_ref[0, o, :, :] = s.astype(o_ref.dtype)     # lane-dense store


def _augment_and_pad(t, add_bias, dp):
    """cat(t, ones) along the feature dim (if add_bias), then zero-pad to dp."""
    B, L, n = t.shape
    parts = [t]
    cur = n
    if add_bias:
        parts.append(jnp.ones((B, L, 1), t.dtype))
        cur += 1
    if dp > cur:
        parts.append(jnp.zeros((B, L, dp - cur), t.dtype))
    return jnp.concatenate(parts, axis=-1)


def biaffine(x, y, weight, *, bias_x=True, bias_y=True):
    """Pallas Biaffine forward.
    x: [B, Lx, n_in], y: [B, Ly, n_in],
    weight: [n_out, n_in + bias_x, n_in + bias_y]  ->  [B, Lx, Ly, n_out]."""
    B, Lx, n_in = x.shape
    _, Ly, _ = y.shape
    n_out, dx, dy = weight.shape
    assert dx == n_in + int(bias_x) and dy == n_in + int(bias_y)

    dpx = _round_up(dx, 128)
    dpy = _round_up(dy, 128)

    x1 = _augment_and_pad(x.astype(jnp.float32), bias_x, dpx)      # [B, Lx, Dpx]
    y1 = _augment_and_pad(y.astype(jnp.float32), bias_y, dpy)      # [B, Ly, Dpy]
    w_pad = jnp.pad(weight.astype(jnp.float32),
                    ((0, 0), (0, dpx - dx), (0, dpy - dy)))
    # (n_out, Dpx, Dpy) -> (Dpx, n_out*Dpy):  w2[p, o*Dpy + q] = W[o, p, q]
    w2 = jnp.transpose(w_pad, (1, 0, 2)).reshape(dpx, n_out * dpy)

    tlx = _pick_row_tile(Lx)
    grid = (B, Lx // tlx)

    out_boxy = pl.pallas_call(
        functools.partial(_biaffine_kernel, n_out=n_out, dpy=dpy),
        out_shape=jax.ShapeDtypeStruct((B, n_out, Lx, Ly), jnp.float32),
        grid=grid,
        in_specs=[
            pl.BlockSpec((1, tlx, dpx), lambda b, i: (b, i, 0)),
            pl.BlockSpec((1, Ly, dpy), lambda b, i: (b, 0, 0)),
            pl.BlockSpec((dpx, n_out * dpy), lambda b, i: (0, 0)),
        ],
        out_specs=pl.BlockSpec((1, n_out, tlx, Ly), lambda b, i: (b, 0, i, 0)),
        compiler_params=pltpu.CompilerParams(
            dimension_semantics=("parallel", "parallel")),
    )(x1, y1, w2)

    # 'boxy' -> 'bxyo'  (matches s.permute(0, 2, 3, 1) in the reference)
    return jnp.transpose(out_boxy, (0, 2, 3, 1))


if __name__ == "__main__":
    key = jax.random.PRNGKey(0)
    kx, ky, kw = jax.random.split(key, 3)

    B, Lx, Ly = 2, 8, 8
    N_IN, N_OUT = 32, 4

    x = jax.random.normal(kx, (B, Lx, N_IN), jnp.float32)
    y = jax.random.normal(ky, (B, Ly, N_IN), jnp.float32)
    # TODO(synk): torch's nn.init.xavier_normal_ is replaced by a deterministic
    # scaled normal; only the initialization differs, forward math is identical.
    fan_scale = jnp.sqrt(2.0 / ((N_IN + 1) + (N_IN + 1)))
    w = jax.random.normal(kw, (N_OUT, N_IN + 1, N_IN + 1), jnp.float32) * fan_scale

    out = biaffine(x, y, w, bias_x=True, bias_y=True)
    out = jax.block_until_ready(out)
    assert out.shape == (B, Lx, Ly, N_OUT)

    # pure-JAX reference (mirrors the torch forward exactly)
    x1 = jnp.concatenate([x, jnp.ones_like(x[..., :1])], axis=-1)
    y1 = jnp.concatenate([y, jnp.ones_like(y[..., :1])], axis=-1)
    ref = jnp.einsum('bxi,oij,byj->boxy', x1, w, y1)
    ref = jnp.transpose(ref, (0, 2, 3, 1))
    err = float(jnp.max(jnp.abs(out - ref)))
    assert jnp.allclose(out, ref, atol=1e-3, rtol=1e-3), err

    print("KERNEL_OK")
</pallas_src>

<mosaic_0001>
module attributes {stable_mosaic.version = 11 : i64} {
  func.func @_biaffine_kernel(%arg0: i32, %arg1: i32, %arg2: memref<1x8x128xf32, #tpu.memory_space<vmem>>, %arg3: memref<1x8x128xf32, #tpu.memory_space<vmem>>, %arg4: memref<128x512xf32, #tpu.memory_space<vmem>>, %arg5: memref<1x4x8x8xf32, #tpu.memory_space<vmem>>) attributes {dimension_semantics = [#tpu.dimension_semantics<parallel>, #tpu.dimension_semantics<parallel>], iteration_bounds = array<i64: 2, 1>, scalar_prefetch = 0 : i64, scratch_operands = 0 : i64, tpu.core_type = #tpu.core_type<tc>, window_params = [{transform_indices = @transform_0, window_bounds = array<i64: 1, 8, 128>}, {transform_indices = @transform_1, window_bounds = array<i64: 1, 8, 128>}, {pipeline_mode = #tpu.pipeline_mode<synchronous>, transform_indices = @transform_2, window_bounds = array<i64: 128, 512>}, {transform_indices = @transform_3, window_bounds = array<i64: 1, 4, 8, 8>}]} {
    %c0 = arith.constant 0 : index
    %c0_0 = arith.constant 0 : index
    %c0_1 = arith.constant 0 : index
    %0 = vector.load %arg2[%c0, %c0_0, %c0_1] : memref<1x8x128xf32, #tpu.memory_space<vmem>>, vector<1x8x128xf32>
    %1 = vector.shape_cast %0 : vector<1x8x128xf32> to vector<8x128xf32>
    %c0_2 = arith.constant 0 : index
    %c0_3 = arith.constant 0 : index
    %c0_4 = arith.constant 0 : index
    %2 = vector.load %arg3[%c0_2, %c0_3, %c0_4] : memref<1x8x128xf32, #tpu.memory_space<vmem>>, vector<1x8x128xf32>
    %3 = vector.shape_cast %2 : vector<1x8x128xf32> to vector<8x128xf32>
    %c0_5 = arith.constant 0 : index
    %c0_6 = arith.constant 0 : index
    %4 = vector.load %arg4[%c0_5, %c0_6] : memref<128x512xf32, #tpu.memory_space<vmem>>, vector<128x512xf32>
    %cst = arith.constant dense<0.000000e+00> : vector<8x512xf32>
    %5 = tpu.matmul %1, %4, %cst {dimension_numbers = #tpu.dot_dimension_numbers<[1], [0], [0], [1], [0, 0, 1, 1], [], []>} : vector<8x128xf32>, vector<128x512xf32>, vector<8x512xf32> -> vector<8x512xf32>
    %6 = vector.extract_strided_slice %5 {offsets = [0, 0], sizes = [8, 128], strides = [1, 1]} : vector<8x512xf32> to vector<8x128xf32>
    %cst_7 = arith.constant dense<0.000000e+00> : vector<8x8xf32>
    %7 = tpu.matmul %6, %3, %cst_7 {dimension_numbers = #tpu.dot_dimension_numbers<[1], [1], [0], [0], [0, 0, 1, 0], [], []>} : vector<8x128xf32>, vector<8x128xf32>, vector<8x8xf32> -> vector<8x8xf32>
    %c0_8 = arith.constant 0 : index
    %c0_9 = arith.constant 0 : index
    %c0_10 = arith.constant 0 : index
    %c0_11 = arith.constant 0 : index
    %8 = vector.load %arg5[%c0_8, %c0_9, %c0_10, %c0_11] : memref<1x4x8x8xf32, #tpu.memory_space<vmem>>, vector<1x1x8x8xf32>
    %9 = vector.shape_cast %8 : vector<1x1x8x8xf32> to vector<8x8xf32>
    %10 = vector.shape_cast %7 : vector<8x8xf32> to vector<1x1x8x8xf32>
    tpu.vector_store %arg5[%c0_8, %c0_9, %c0_10, %c0_11], %10 {strides = array<i32>} : memref<1x4x8x8xf32, #tpu.memory_space<vmem>>, vector<1x1x8x8xf32>,
    %11 = vector.extract_strided_slice %5 {offsets = [0, 128], sizes = [8, 128], strides = [1, 1]} : vector<8x512xf32> to vector<8x128xf32>
    %cst_12 = arith.constant dense<0.000000e+00> : vector<8x8xf32>
    %12 = tpu.matmul %11, %3, %cst_12 {dimension_numbers = #tpu.dot_dimension_numbers<[1], [1], [0], [0], [0, 0, 1, 0], [], []>} : vector<8x128xf32>, vector<8x128xf32>, vector<8x8xf32> -> vector<8x8xf32>
    %c0_13 = arith.constant 0 : index
    %c1 = arith.constant 1 : index
    %c0_14 = arith.constant 0 : index
    %c0_15 = arith.constant 0 : index
    %13 = vector.load %arg5[%c0_13, %c1, %c0_14, %c0_15] : memref<1x4x8x8xf32, #tpu.memory_space<vmem>>, vector<1x1x8x8xf32>
    %14 = vector.shape_cast %13 : vector<1x1x8x8xf32> to vector<8x8xf32>
    %15 = vector.shape_cast %12 : vector<8x8xf32> to vector<1x1x8x8xf32>
    tpu.vector_store %arg5[%c0_13, %c1, %c0_14, %c0_15], %15 {strides = array<i32>} : memref<1x4x8x8xf32, #tpu.memory_space<vmem>>, vector<1x1x8x8xf32>,
    %16 = vector.extract_strided_slice %5 {offsets = [0, 256], sizes = [8, 128], strides = [1, 1]} : vector<8x512xf32> to vector<8x128xf32>
    %cst_16 = arith.constant dense<0.000000e+00> : vector<8x8xf32>
    %17 = tpu.matmul %16, %3, %cst_16 {dimension_numbers = #tpu.dot_dimension_numbers<[1], [1], [0], [0], [0, 0, 1, 0], [], []>} : vector<8x128xf32>, vector<8x128xf32>, vector<8x8xf32> -> vector<8x8xf32>
    %c0_17 = arith.constant 0 : index
    %c2 = arith.constant 2 : index
    %c0_18 = arith.constant 0 : index
    %c0_19 = arith.constant 0 : index
    %18 = vector.load %arg5[%c0_17, %c2, %c0_18, %c0_19] : memref<1x4x8x8xf32, #tpu.memory_space<vmem>>, vector<1x1x8x8xf32>
    %19 = vector.shape_cast %18 : vector<1x1x8x8xf32> to vector<8x8xf32>
    %20 = vector.shape_cast %17 : vector<8x8xf32> to vector<1x1x8x8xf32>
    tpu.vector_store %arg5[%c0_17, %c2, %c0_18, %c0_19], %20 {strides = array<i32>} : memref<1x4x8x8xf32, #tpu.memory_space<vmem>>, vector<1x1x8x8xf32>,
    %21 = vector.extract_strided_slice %5 {offsets = [0, 384], sizes = [8, 128], strides = [1, 1]} : vector<8x512xf32> to vector<8x128xf32>
    %cst_20 = arith.constant dense<0.000000e+00> : vector<8x8xf32>
    %22 = tpu.matmul %21, %3, %cst_20 {dimension_numbers = #tpu.dot_dimension_numbers<[1], [1], [0], [0], [0, 0, 1, 0], [], []>} : vector<8x128xf32>, vector<8x128xf32>, vector<8x8xf32> -> vector<8x8xf32>
    %c0_21 = arith.constant 0 : index
    %c3 = arith.constant 3 : index
    %c0_22 = arith.constant 0 : index
    %c0_23 = arith.constant 0 : index
    %23 = vector.load %arg5[%c0_21, %c3, %c0_22, %c0_23] : memref<1x4x8x8xf32, #tpu.memory_space<vmem>>, vector<1x1x8x8xf32>
    %24 = vector.shape_cast %23 : vector<1x1x8x8xf32> to vector<8x8xf32>
    %25 = vector.shape_cast %22 : vector<8x8xf32> to vector<1x1x8x8xf32>
    tpu.vector_store %arg5[%c0_21, %c3, %c0_22, %c0_23], %25 {strides = array<i32>} : memref<1x4x8x8xf32, #tpu.memory_space<vmem>>, vector<1x1x8x8xf32>,
    return
  }
  func.func @transform_0(%arg0: i32, %arg1: i32) -> (i32, i32, i32) {
    %c0_i32 = arith.constant 0 : i32
    %c0_i32_0 = arith.constant 0 : i32
    return %arg0, %arg1, %c0_i32 : i32, i32, i32
  }
  func.func @transform_1(%arg0: i32, %arg1: i32) -> (i32, i32, i32) {
    %c0_i32 = arith.constant 0 : i32
    %c0_i32_0 = arith.constant 0 : i32
    %c0_i32_1 = arith.constant 0 : i32
    return %arg0, %c0_i32, %c0_i32_0 : i32, i32, i32
  }
  func.func @transform_2(%arg0: i32, %arg1: i32) -> (i32, i32) {
    %c0_i32 = arith.constant 0 : i32
    %c0_i32_0 = arith.constant 0 : i32
    %c0_i32_1 = arith.constant 0 : i32
    return %c0_i32, %c0_i32_0 : i32, i32
  }
  func.func @transform_3(%arg0: i32, %arg1: i32) -> (i32, i32, i32, i32) {
    %c0_i32 = arith.constant 0 : i32
    %c0_i32_0 = arith.constant 0 : i32
    %c0_i32_1 = arith.constant 0 : i32
    return %arg0, %c0_i32, %arg1, %c0_i32_0 : i32, i32, i32, i32
  }
}

</mosaic_0001>

<llo_original>
// kernel: tpu_custom_call.1
$region0: #{tpu_custom_call.1}
  #allocation0 [shape = 'u32[]', space=smem, size = 0x4, offset = 0x4, fixed_abs, tag = 'smem constant byte address 0x4 - core index']
  #allocation1 [shape = 'u32[144,128]{1,0:T(1,128)}', space=vmem, size = 0x12000, scoped, tag = 'internal scratch']
  %s0 = inlined_call_operand.hbm [shape: f32[2,8,128], index: 0, kind: input, shape index: {}]
  %s1 = inlined_call_operand.hbm [shape: f32[2,8,128], index: 1, kind: input, shape index: {}]
  %s2 = inlined_call_operand.hbm [shape: f32[128,512], index: 2, kind: input, shape index: {}]
  %s3 = inlined_call_operand.hbm [shape: f32[2,4,8,8], index: 3, kind: output, shape index: {}]
  %s4 = sld [smem:[#allocation0]]
  $region57: #{tpu_custom_call.1} parent=0
    _
  %s6 = ssub.s32 1, %s4
  %s7 = scalar_select 0, %s6, %s4
  $region1: #{tpu_custom_call.1} parent=0
    #allocation2 [shape = 'u8[8192]{0}', space=vmem, size = 0x2000, scoped, tag = 'input window, operand 0']
    #allocation3 [shape = 's32[2]{0}', space=sflag, size = 0x8, scoped, tag = 'scoped memory for tpu_custom_call.1']
    #allocation4 [shape = 's32[2]{0}', space=sflag, size = 0x8, scoped, tag = 'scoped memory for tpu_custom_call.1']
    #allocation5 [shape = 'u8[8192]{0}', space=vmem, size = 0x2000, scoped, tag = 'input window, operand 1']
    #allocation6 [shape = 's32[2]{0}', space=sflag, size = 0x8, scoped, tag = 'scoped memory for tpu_custom_call.1']
    #allocation7 [shape = 'u8[262144]{0}', space=vmem, size = 0x40000, scoped, tag = 'input window, operand 2, single buffered']
    #allocation8 [shape = 'u8[32768]{0}', space=vmem, size = 0x8000, scoped, tag = 'output window, operand 0']
    %8 = vsyncpa [#allocation3], 0
    %s9 = scalar_lea.sflag [#allocation3], 1
    %10 = vsyncpa %s9, 0
    %11 = vsyncpa [#allocation6], 0
    %s12 = scalar_lea.sflag [#allocation6], 1
    %13 = vsyncpa %s12, 0
    %14 = vsyncpa [#allocation4], 0
    %s15 = scalar_lea.sflag [#allocation4], 1
    %16 = vsyncpa %s15, 0
    loop: start=0, step=1, limit=4
    $region2: #{tpu_custom_call.1} parent=1 // loop_pre_header
      _
    $region3: #{tpu_custom_call.1} parent=1 // loop_header
      %s18 = sphi 0, %s22
      %p19 = scmp.ge.s32.totalorder %s18, 4
      %s25 = sphi 0, %s37
      %s26 = sphi 0, %s33
      %s27 = sphi 0, %s25
      %s28 = sphi 0, %s26
      %s29 = sphi 0, %s27
      %s30 = sphi 0, %s28
      %s42 = sphi 0, %s44
      %s45 = sphi 0, %s42
      %s46 = sphi 0, %s45
      %s62 = sphi 0, %s46
      %s68 = sphi 0, %s70
      %s71 = sphi 0, %s68
      %s72 = sphi 0, %s71
      %s88 = sphi 0, %s72
      %s92 = sphi 0, %s92
      %s94 = sphi 0, %s92
      %s95 = sphi 0, %s94
      %s109 = sphi 0, %s95
      %s117 = sphi 0, %s119
      %s120 = sphi 0, %s117
      %s121 = sphi 0, %s120
      %s137 = sphi 0, %s121
    $region4: #{tpu_custom_call.1} parent=1 // loop_header_branch
      %21 = sbr.rel (%p19) target = $region8
    $region5: #{tpu_custom_call.1} parent=1 // loop_body
      %s23 = ssub.s32 %s18, 1
      %s24 = ssub.s32 %s18, 2
      %s31 = sadd.s32 1, %s26
      %p32 = scmp.ge.s32.totalorder %s31, 1
      %s33 = scalar_select %p32, 0, %s31
      %s34 = sadd.s32 1, %s25
      %s35 = scalar_select %p32, %s34, %s25
      %p36 = scmp.ge.s32.totalorder %s35, 2
      %s37 = scalar_select %p36, 0, %s35
      %s38 = ssub.s32 %s25, %s37
      %s39 = ssub.s32 %s26, %s33
      %s40 = sor.u32 %s38, %s39
      %p41 = scmp.eq.s32.totalorder %s40, 0
      %s43 = sadd.s32 %s42, 1
      %s44 = scalar_select %p41, %s42, %s43
      %p47 = pneg %p41
      %p48 = scmp.eq.s32.totalorder %s18, 1
      %p49 = por %p47, %p48
      %p50 = scmp.ne.s32.totalorder %s42, %s45
      %p51 = scmp.eq.s32.totalorder %s18, 0
      %p52 = por %p50, %p51
      %p53 = scmp.ne.s32.totalorder %s42, %s45
      %p54 = scmp.eq.s32.totalorder %s23, 1
      %p55 = por %p53, %p54
      %p56 = scmp.ne.s32.totalorder %s45, %s46
      %p57 = scmp.eq.s32.totalorder %s23, 0
      %p58 = por %p56, %p57
      %p59 = scmp.ne.s32.totalorder %s45, %s46
      %p60 = scmp.eq.s32.totalorder %s24, 1
      %p61 = por %p59, %p60
      %p63 = scmp.ne.s32.totalorder %s46, %s62
      %p64 = scmp.eq.s32.totalorder %s24, 0
      %p65 = por %p63, %p64
      %s66 = ssub.s32 %s25, %s37
      %p67 = scmp.eq.s32.totalorder %s66, 0
      %s69 = sadd.s32 %s68, 1
      %s70 = scalar_select %p67, %s68, %s69
      %p73 = pneg %p67
      %p74 = scmp.eq.s32.totalorder %s18, 1
      %p75 = por %p73, %p74
      %p76 = scmp.ne.s32.totalorder %s68, %s71
      %p77 = scmp.eq.s32.totalorder %s18, 0
      %p78 = por %p76, %p77
      %p79 = scmp.ne.s32.totalorder %s68, %s71
      %p80 = scmp.eq.s32.totalorder %s23, 1
      %p81 = por %p79, %p80
      %p82 = scmp.ne.s32.totalorder %s71, %s72
      %p83 = scmp.eq.s32.totalorder %s23, 0
      %p84 = por %p82, %p83
      %p85 = scmp.ne.s32.totalorder %s71, %s72
      %p86 = scmp.eq.s32.totalorder %s24, 1
      %p87 = por %p85, %p86
      %p89 = scmp.ne.s32.totalorder %s72, %s88
      %p90 = scmp.eq.s32.totalorder %s24, 0
      %p91 = por %p89, %p90
      %s93 = sadd.s32 %s92, 1
      %p96 = scmp.eq.s32.totalorder %s18, 1
      %p97 = scmp.ne.s32.totalorder %s92, %s94
      %p98 = scmp.eq.s32.totalorder %s18, 0
      %p99 = por %p97, %p98
      %p100 = scmp.ne.s32.totalorder %s92, %s94
      %p101 = scmp.eq.s32.totalorder %s23, 1
      %p102 = por %p100, %p101
      %p103 = scmp.ne.s32.totalorder %s94, %s95
      %p104 = scmp.eq.s32.totalorder %s23, 0
      %p105 = por %p103, %p104
      %p106 = scmp.ne.s32.totalorder %s94, %s95
      %p107 = scmp.eq.s32.totalorder %s24, 1
      %p108 = por %p106, %p107
      %p110 = scmp.ne.s32.totalorder %s95, %s109
      %p111 = scmp.eq.s32.totalorder %s24, 0
      %p112 = por %p110, %p111
      %s113 = ssub.s32 %s25, %s37
      %s114 = ssub.s32 %s26, %s33
      %s115 = sor.u32 %s113, %s114
      %p116 = scmp.eq.s32.totalorder %s115, 0
      %s118 = sadd.s32 %s117, 1
      %s119 = scalar_select %p116, %s117, %s118
      %p122 = pneg %p116
      %p123 = scmp.eq.s32.totalorder %s18, 1
      %p124 = por %p122, %p123
      %p125 = scmp.ne.s32.totalorder %s117, %s120
      %p126 = scmp.eq.s32.totalorder %s18, 0
      %p127 = por %p125, %p126
      %p128 = scmp.ne.s32.totalorder %s117, %s120
      %p129 = scmp.eq.s32.totalorder %s23, 1
      %p130 = por %p128, %p129
      %p131 = scmp.ne.s32.totalorder %s120, %s121
      %p132 = scmp.eq.s32.totalorder %s23, 0
      %p133 = por %p131, %p132
      %p134 = scmp.ne.s32.totalorder %s120, %s121
      %p135 = scmp.eq.s32.totalorder %s24, 1
      %p136 = por %p134, %p135
      %p138 = scmp.ne.s32.totalorder %s121, %s137
      %p139 = scmp.eq.s32.totalorder %s24, 0
      %p140 = por %p138, %p139
      %p141 = scmp.le.s32.totalorder 1, %s18
      %p142 = scmp.lt.s32.totalorder %s18, 3
      %p143 = pnand %p141, %p142
      %p144 = pneg %p143
      // Predicated region
      $region9: #{tpu_custom_call.1} parent=5 // pred_check
        _
      $region10: #{tpu_custom_call.1} parent=5 // pred_check_branch
        %146 = sbr.rel (%p143) target = $region12
      $region11: #{tpu_custom_call.1} parent=5 // pred_region
        %s147 = ssub.s32 %s18, 1
        // Predicated region
        $region13: #{tpu_custom_call.1} parent=11 // pred_check
          %p148 = pneg %p105
        $region14: #{tpu_custom_call.1} parent=11 // pred_check_branch
          %150 = sbr.rel (%p148) target = $region16
        $region15: #{tpu_custom_call.1} parent=11 // pred_region
          %s152 = ssub.s32 8192, 8192
          %153 = vsyncadd [#allocation6], %s152
          %s154 = sshll.u32 [#allocation7], 4
          %s155 = int_to_ptr.vmem [resolvable:$true] %s154
          %160 = dma.hbm_to_vmem [thread:$0]  %s2, 8192, %s155, [#allocation6], 512, 512, 32
        $region16: #{tpu_custom_call.1} parent=11 // pred_fallthru
          _
      $region12: #{tpu_custom_call.1} parent=5 // pred_fallthru
        _
      %p161 = scmp.lt.s32.totalorder %s18, 2
      // Predicated region
      $region17: #{tpu_custom_call.1} parent=5 // pred_check
        %p162 = pneg %p161
      $region18: #{tpu_custom_call.1} parent=5 // pred_check_branch
        %164 = sbr.rel (%p162) target = $region20
      $region19: #{tpu_custom_call.1} parent=5 // pred_region
        // Predicated region
        $region21: #{tpu_custom_call.1} parent=19 // pred_check
          %p165 = pneg %p52
        $region22: #{tpu_custom_call.1} parent=19 // pred_check_branch
          %167 = sbr.rel (%p165) target = $region24
        $region23: #{tpu_custom_call.1} parent=19 // pred_region
          %s168 = sand.u32 %s42, 1
          %s169 = scalar_lea.sflag [#allocation3], %s168
          %s170 = sand.u32 %s42, 1
          %s171 = smul.addr %s170, 8
          %s172 = scalar_lea.vmem [#allocation2], %s171
          %s174 = ssub.s32 128, 128
          %175 = vsyncadd %s169, %s174
          %s176 = sadd.s32 %s26, %s25
          %s177 = smul.addr %s176, 128
          %s178 = scalar_lea.hbm %s0, %s177
          %s180 = sshll.u32 %s172, 4
          %s181 = int_to_ptr.vmem [resolvable:$true] %s180
          %183 = dma.hbm_to_vmem [thread:$0]  %s178, 128, %s181, %s169
        $region24: #{tpu_custom_call.1} parent=19 // pred_fallthru
          _
        // Predicated region
        $region25: #{tpu_custom_call.1} parent=19 // pred_check
          %p184 = pneg %p78
        $region26: #{tpu_custom_call.1} parent=19 // pred_check_branch
          %186 = sbr.rel (%p184) target = $region28
        $region27: #{tpu_custom_call.1} parent=19 // pred_region
          %s187 = sand.u32 %s18, 1
          %s188 = scalar_lea.sflag [#allocation6], %s187
          %s189 = sand.u32 %s68, 1
          %s190 = smul.addr %s189, 8
          %s191 = scalar_lea.vmem [#allocation5], %s190
          %s193 = ssub.s32 128, 128
          %194 = vsyncadd %s188, %s193
          %s195 = smul.addr %s25, 128
          %s196 = scalar_lea.hbm %s1, %s195
          %s198 = sshll.u32 %s191, 4
          %s199 = int_to_ptr.vmem [resolvable:$true] %s198
          %201 = dma.hbm_to_vmem [thread:$0]  %s196, 128, %s199, %s188
        $region28: #{tpu_custom_call.1} parent=19 // pred_fallthru
          _
      $region20: #{tpu_custom_call.1} parent=5 // pred_fallthru
        _
      %p202 = scmp.le.s32.totalorder 1, %s18
      %p203 = scmp.lt.s32.totalorder %s18, 3
      %p204 = pnand %p202, %p203
      %p205 = pneg %p204
      // Predicated region
      $region29: #{tpu_custom_call.1} parent=5 // pred_check
        _
      $region30: #{tpu_custom_call.1} parent=5 // pred_check_branch
        %207 = sbr.rel (%p204) target = $region32
      $region31: #{tpu_custom_call.1} parent=5 // pred_region
        %s208 = ssub.s32 %s18, 1
        %s209 = sand.u32 %s45, 1
        %s210 = scalar_lea.sflag [#allocation3], %s209
        %s211 = sand.u32 %s45, 1
        %s212 = smul.addr %s211, 8
        %s213 = scalar_lea.vmem [#allocation2], %s212
        // Predicated region
        $region33: #{tpu_custom_call.1} parent=31 // pred_check
          %p214 = pneg %p58
        $region34: #{tpu_custom_call.1} parent=31 // pred_check_branch
          %216 = sbr.rel (%p214) target = $region36
        $region35: #{tpu_custom_call.1} parent=31 // pred_region
          %217 = dma.done %s210, 128
        $region36: #{tpu_custom_call.1} parent=31 // pred_fallthru
          _
        %s218 = sand.u32 %s23, 1
        %s219 = scalar_lea.sflag [#allocation6], %s218
        %s220 = sand.u32 %s71, 1
        %s221 = smul.addr %s220, 8
        %s222 = scalar_lea.vmem [#allocation5], %s221
        // Predicated region
        $region37: #{tpu_custom_call.1} parent=31 // pred_check
          %p223 = pneg %p84
        $region38: #{tpu_custom_call.1} parent=31 // pred_check_branch
          %225 = sbr.rel (%p223) target = $region40
        $region39: #{tpu_custom_call.1} parent=31 // pred_region
          %226 = dma.done %s219, 128
        $region40: #{tpu_custom_call.1} parent=31 // pred_fallthru
          _
        // Predicated region
        $region41: #{tpu_custom_call.1} parent=31 // pred_check
          %p227 = pneg %p105
        $region42: #{tpu_custom_call.1} parent=31 // pred_check_branch
          %229 = sbr.rel (%p227) target = $region44
        $region43: #{tpu_custom_call.1} parent=31 // pred_region
          %230 = dma.done [#allocation6], 8192
        $region44: #{tpu_custom_call.1} parent=31 // pred_fallthru
          _
        %s231 = sand.u32 %s45, 1
        %s232 = scalar_lea.sflag [#allocation3], %s231
        %s233 = sand.u32 %s45, 1
        %s234 = smul.addr %s233, 8
        %s235 = scalar_lea.vmem [#allocation2], %s234
        %p236 = pneg %p58
        %p237 = pneg %p55
        %s238 = sand.u32 %s23, 1
        %s239 = scalar_lea.sflag [#allocation6], %s238
        %s240 = sand.u32 %s71, 1
        %s241 = smul.addr %s240, 8
        %s242 = scalar_lea.vmem [#allocation5], %s241
        %p243 = pneg %p84
        %p244 = pneg %p81
        %p245 = pneg %p105
        %p246 = pneg %p102
        %p247 = pneg %p133
        %p248 = pneg %p130
        %s249 = sand.u32 %s120, 1
        %s250 = scalar_lea.sflag [#allocation4], %s249
        %s251 = sand.u32 %s120, 1
        %s252 = smul.addr %s251, 32
        %s253 = scalar_lea.vmem [#allocation8], %s252
        %v254 = vld [vmem:[%s213] sm:$0xff]
        %v255 = vld [vmem:[%s222] sm:$0xff]
        %v256 = vld [vmem:[#allocation7] sm:$0xff]
        %v257 = vld [vmem:[#allocation7 + $0x8] sm:$0xff]
        %v258 = vld [vmem:[#allocation7 + $0x10] sm:$0xff]
        %v259 = vld [vmem:[#allocation7 + $0x18] sm:$0xff]
        %v260 = vld [vmem:[#allocation7 + $0x20] sm:$0xff]
        %v261 = vld [vmem:[#allocation7 + $0x28] sm:$0xff]
        %v262 = vld [vmem:[#allocation7 + $0x30] sm:$0xff]
        %v263 = vld [vmem:[#allocation7 + $0x38] sm:$0xff]
        %v264 = vld [vmem:[#allocation7 + $0x40] sm:$0xff]
        %v265 = vld [vmem:[#allocation7 + $0x48] sm:$0xff]
        %v266 = vld [vmem:[#allocation7 + $0x50] sm:$0xff]
        %v267 = vld [vmem:[#allocation7 + $0x58] sm:$0xff]
        %v268 = vld [vmem:[#allocation7 + $0x60] sm:$0xff]
        %v269 = vld [vmem:[#allocation7 + $0x68] sm:$0xff]
        %v270 = vld [vmem:[#allocation7 + $0x70] sm:$0xff]
        %v271 = vld [vmem:[#allocation7 + $0x78] sm:$0xff]
        %v272 = vld [vmem:[#allocation7 + $0x80] sm:$0xff]
        %v273 = vld [vmem:[#allocation7 + $0x88] sm:$0xff]
        %v274 = vld [vmem:[#allocation7 + $0x90] sm:$0xff]
        %v275 = vld [vmem:[#allocation7 + $0x98] sm:$0xff]
        %v276 = vld [vmem:[#allocation7 + $0xa0] sm:$0xff]
        %v277 = vld [vmem:[#allocation7 + $0xa8] sm:$0xff]
        %v278 = vld [vmem:[#allocation7 + $0xb0] sm:$0xff]
        %v279 = vld [vmem:[#allocation7 + $0xb8] sm:$0xff]
        %v280 = vld [vmem:[#allocation7 + $0xc0] sm:$0xff]
        %v281 = vld [vmem:[#allocation7 + $0xc8] sm:$0xff]
        %v282 = vld [vmem:[#allocation7 + $0xd0] sm:$0xff]
        %v283 = vld [vmem:[#allocation7 + $0xd8] sm:$0xff]
        %v284 = vld [vmem:[#allocation7 + $0xe0] sm:$0xff]
        %v285 = vld [vmem:[#allocation7 + $0xe8] sm:$0xff]
        %v286 = vld [vmem:[#allocation7 + $0xf0] sm:$0xff]
        %v287 = vld [vmem:[#allocation7 + $0xf8] sm:$0xff]
        %v288 = vld [vmem:[#allocation7 + $0x100] sm:$0xff]
        %v289 = vld [vmem:[#allocation7 + $0x108] sm:$0xff]
        %v290 = vld [vmem:[#allocation7 + $0x110] sm:$0xff]
        %v291 = vld [vmem:[#allocation7 + $0x118] sm:$0xff]
        %v292 = vld [vmem:[#allocation7 + $0x120] sm:$0xff]
        %v293 = vld [vmem:[#allocation7 + $0x128] sm:$0xff]
        %v294 = vld [vmem:[#allocation7 + $0x130] sm:$0xff]
        %v295 = vld [vmem:[#allocation7 + $0x138] sm:$0xff]
        %v296 = vld [vmem:[#allocation7 + $0x140] sm:$0xff]
        %v297 = vld [vmem:[#allocation7 + $0x148] sm:$0xff]
        %v298 = vld [vmem:[#allocation7 + $0x150] sm:$0xff]
        %v299 = vld [vmem:[#allocation7 + $0x158] sm:$0xff]
        %v300 = vld [vmem:[#allocation7 + $0x160] sm:$0xff]
        %v301 = vld [vmem:[#allocation7 + $0x168] sm:$0xff]
        %v302 = vld [vmem:[#allocation7 + $0x170] sm:$0xff]
        %v303 = vld [vmem:[#allocation7 + $0x178] sm:$0xff]
        %v304 = vld [vmem:[#allocation7 + $0x180] sm:$0xff]
        %v305 = vld [vmem:[#allocation7 + $0x188] sm:$0xff]
        %v306 = vld [vmem:[#allocation7 + $0x190] sm:$0xff]
        %v307 = vld [vmem:[#allocation7 + $0x198] sm:$0xff]
        %v308 = vld [vmem:[#allocation7 + $0x1a0] sm:$0xff]
        %v309 = vld [vmem:[#allocation7 + $0x1a8] sm:$0xff]
        %v310 = vld [vmem:[#allocation7 + $0x1b0] sm:$0xff]
        %v311 = vld [vmem:[#allocation7 + $0x1b8] sm:$0xff]
        %v312 = vld [vmem:[#allocation7 + $0x1c0] sm:$0xff]
        %v313 = vld [vmem:[#allocation7 + $0x1c8] sm:$0xff]
        %v314 = vld [vmem:[#allocation7 + $0x1d0] sm:$0xff]
        %v315 = vld [vmem:[#allocation7 + $0x1d8] sm:$0xff]
        %v316 = vld [vmem:[#allocation7 + $0x1e0] sm:$0xff]
        %v317 = vld [vmem:[#allocation7 + $0x1e8] sm:$0xff]
        %v318 = vld [vmem:[#allocation7 + $0x1f0] sm:$0xff]
        %v319 = vld [vmem:[#allocation7 + $0x1f8] sm:$0xff]
        %320 = vmatprep.subr.mxu0 %v317
        %321 = vmatpush1.msra.mxu0 %v316
        %322 = vmatprep.subr.mxu0 %v313
        %323 = vmatpush1.msra.mxu0 %v312
        %324 = vmatprep.subr.mxu0 %v309
        %325 = vmatpush1.msra.mxu0 %v308
        %326 = vmatprep.subr.mxu0 %v305
        %327 = vmatpush1.msra.mxu0 %v304
        %328 = vmatprep.subr.mxu0 %v301
        %329 = vmatpush1.msra.mxu0 %v300
        %330 = vmatprep.subr.mxu0 %v297
        %331 = vmatpush1.msra.mxu0 %v296
        %332 = vmatprep.subr.mxu0 %v293
        %333 = vmatpush1.msra.mxu0 %v292
        %334 = vmatprep.subr.mxu0 %v289
        %335 = vmatpush1.msra.mxu0 %v288
        %336 = vmatprep.subr.mxu0 %v285
        %337 = vmatpush1.msra.mxu0 %v284
        %338 = vmatprep.subr.mxu0 %v281
        %339 = vmatpush1.msra.mxu0 %v280
        %340 = vmatprep.subr.mxu0 %v277
        %341 = vmatpush1.msra.mxu0 %v276
        %342 = vmatprep.subr.mxu0 %v273
        %343 = vmatpush1.msra.mxu0 %v272
        %344 = vmatprep.subr.mxu0 %v269
        %345 = vmatpush1.msra.mxu0 %v268
        %346 = vmatprep.subr.mxu0 %v265
        %347 = vmatpush1.msra.mxu0 %v264
        %348 = vmatprep.subr.mxu0 %v261
        %349 = vmatpush1.msra.mxu0 %v260
        %350 = vmatprep.subr.mxu0 %v257
        %351 = vmatpush1.msra.mxu0 %v256
        %352 = vmatprep.subr.mxu0 0.0
        %353 = vmatpush2.msra.mxu0 0.0
        %354 = vmatprep.subr.mxu0 0.0
        %355 = vmatpush2.msra.mxu0 0.0
        %356 = vmatprep.subr.mxu0 0.0
        %357 = vmatpush2.msra.mxu0 0.0
        %358 = vmatprep.subr.mxu0 0.0
        %359 = vmatpush2.msra.mxu0 0.0
        %360 = vmatprep.subr.mxu0 0.0
        %361 = vmatpush2.msra.mxu0 0.0
        %362 = vmatprep.subr.mxu0 0.0
        %363 = vmatpush2.msra.mxu0 0.0
        %364 = vmatprep.subr.mxu0 0.0
        %365 = vmatpush2.msra.mxu0 0.0
        %366 = vmatprep.subr.mxu0 0.0
        %367 = vmatpush2.msra.mxu0 0.0
        %368 = vmatprep.subr.mxu0 0.0
        %369 = vmatpush2.msra.mxu0 0.0
        %370 = vmatprep.subr.mxu0 0.0
        %371 = vmatpush2.msra.mxu0 0.0
        %372 = vmatprep.subr.mxu0 0.0
        %373 = vmatpush2.msra.mxu0 0.0
        %374 = vmatprep.subr.mxu0 0.0
        %375 = vmatpush2.msra.mxu0 0.0
        %376 = vmatprep.subr.mxu0 0.0
        %377 = vmatpush2.msra.mxu0 0.0
        %378 = vmatprep.subr.mxu0 0.0
        %379 = vmatpush2.msra.mxu0 0.0
        %380 = vmatprep.subr.mxu0 0.0
        %381 = vmatpush2.msra.mxu0 0.0
        %382 = vmatprep.subr.mxu0 0.0
        %383 = vmatpush2.msra.mxu0 0.0
        %384 = vmatprep.mubr.f32.mxu0 0.0
        %385 = vmatmul.mubr.f32.gmra.mxu0 %v254
        %v386 = vpop.f32.mrf.mxu0
        %v387 = vadd.f32 0.0, %v386
        %v388 = vpop.f32.mrf.mxu0
        %v389 = vadd.f32 0.0, %v388
        %390 = vdwg.mxu0
        %391 = vmatprep.subr.mxu0 %v319
        %392 = vmatpush1.msra.mxu0 %v318
        %393 = vmatprep.subr.mxu0 %v315
        %394 = vmatpush1.msra.mxu0 %v314
        %395 = vmatprep.subr.mxu0 %v311
        %396 = vmatpush1.msra.mxu0 %v310
        %397 = vmatprep.subr.mxu0 %v307
        %398 = vmatpush1.msra.mxu0 %v306
        %399 = vmatprep.subr.mxu0 %v303
        %400 = vmatpush1.msra.mxu0 %v302
        %401 = vmatprep.subr.mxu0 %v299
        %402 = vmatpush1.msra.mxu0 %v298
        %403 = vmatprep.subr.mxu0 %v295
        %404 = vmatpush1.msra.mxu0 %v294
        %405 = vmatprep.subr.mxu0 %v291
        %406 = vmatpush1.msra.mxu0 %v290
        %407 = vmatprep.subr.mxu0 %v287
        %408 = vmatpush1.msra.mxu0 %v286
        %409 = vmatprep.subr.mxu0 %v283
        %410 = vmatpush1.msra.mxu0 %v282
        %411 = vmatprep.subr.mxu0 %v279
        %412 = vmatpush1.msra.mxu0 %v278
        %413 = vmatprep.subr.mxu0 %v275
        %414 = vmatpush1.msra.mxu0 %v274
        %415 = vmatprep.subr.mxu0 %v271
        %416 = vmatpush1.msra.mxu0 %v270
        %417 = vmatprep.subr.mxu0 %v267
        %418 = vmatpush1.msra.mxu0 %v266
        %419 = vmatprep.subr.mxu0 %v263
        %420 = vmatpush1.msra.mxu0 %v262
        %421 = vmatprep.subr.mxu0 %v259
        %422 = vmatpush1.msra.mxu0 %v258
        %423 = vmatprep.subr.mxu0 0.0
        %424 = vmatpush2.msra.mxu0 0.0
        %425 = vmatprep.subr.mxu0 0.0
        %426 = vmatpush2.msra.mxu0 0.0
        %427 = vmatprep.subr.mxu0 0.0
        %428 = vmatpush2.msra.mxu0 0.0
        %429 = vmatprep.subr.mxu0 0.0
        %430 = vmatpush2.msra.mxu0 0.0
        %431 = vmatprep.subr.mxu0 0.0
        %432 = vmatpush2.msra.mxu0 0.0
        %433 = vmatprep.subr.mxu0 0.0
        %434 = vmatpush2.msra.mxu0 0.0
        %435 = vmatprep.subr.mxu0 0.0
        %436 = vmatpush2.msra.mxu0 0.0
        %437 = vmatprep.subr.mxu0 0.0
        %438 = vmatpush2.msra.mxu0 0.0
        %439 = vmatprep.subr.mxu0 0.0
        %440 = vmatpush2.msra.mxu0 0.0
        %441 = vmatprep.subr.mxu0 0.0
        %442 = vmatpush2.msra.mxu0 0.0
        %443 = vmatprep.subr.mxu0 0.0
        %444 = vmatpush2.msra.mxu0 0.0
        %445 = vmatprep.subr.mxu0 0.0
        %446 = vmatpush2.msra.mxu0 0.0
        %447 = vmatprep.subr.mxu0 0.0
        %448 = vmatpush2.msra.mxu0 0.0
        %449 = vmatprep.subr.mxu0 0.0
        %450 = vmatpush2.msra.mxu0 0.0
        %451 = vmatprep.subr.mxu0 0.0
        %452 = vmatpush2.msra.mxu0 0.0
        %453 = vmatprep.subr.mxu0 0.0
        %454 = vmatpush2.msra.mxu0 0.0
        %455 = vmatprep.mubr.f32.mxu0 0.0
        %456 = vmatmul.mubr.f32.gmra.mxu0 %v254
        %v457 = vpop.f32.mrf.mxu0
        %v458 = vadd.f32 0.0, %v457
        %v459 = vpop.f32.mrf.mxu0
        %v460 = vadd.f32 0.0, %v459
        %461 = vdwg.mxu0
        %462 = vmatprep.subr.mxu0 0.0
        %463 = vmatpush1.xpose.msra.mxu0 0.0
        %464 = vmatprep.subr.mxu0 0.0
        %465 = vmatpush1.xpose.msra.mxu0 0.0
        %466 = vmatprep.subr.mxu0 0.0
        %467 = vmatpush1.xpose.msra.mxu0 0.0
        %468 = vmatprep.subr.mxu0 0.0
        %469 = vmatpush1.xpose.msra.mxu0 0.0
        %470 = vmatprep.subr.mxu0 0.0
        %471 = vmatpush1.xpose.msra.mxu0 0.0
        %472 = vmatprep.subr.mxu0 0.0
        %473 = vmatpush1.xpose.msra.mxu0 0.0
        %474 = vmatprep.subr.mxu0 0.0
        %475 = vmatpush1.xpose.msra.mxu0 0.0
        %476 = vmatprep.subr.mxu0 0.0
        %477 = vmatpush1.xpose.msra.mxu0 0.0
        %478 = vmatprep.subr.mxu0 0.0
        %479 = vmatpush1.xpose.msra.mxu0 0.0
        %480 = vmatprep.subr.mxu0 0.0
        %481 = vmatpush1.xpose.msra.mxu0 0.0
        %482 = vmatprep.subr.mxu0 0.0
        %483 = vmatpush1.xpose.msra.mxu0 0.0
        %484 = vmatprep.subr.mxu0 0.0
        %485 = vmatpush1.xpose.msra.mxu0 0.0
        %486 = vmatprep.subr.mxu0 0.0
        %487 = vmatpush1.xpose.msra.mxu0 0.0
        %488 = vmatprep.subr.mxu0 0.0
        %489 = vmatpush1.xpose.msra.mxu0 0.0
        %490 = vmatprep.subr.mxu0 0.0
        %491 = vmatpush1.xpose.msra.mxu0 0.0
        %492 = vmatprep.subr.mxu0 0.0
        %493 = vmatpush1.xpose.msra.mxu0 %v255
        %494 = vmatprep.subr.mxu0 0.0
        %495 = vmatpush2.xpose.msra.mxu0 0.0
        %496 = vmatprep.subr.mxu0 0.0
        %497 = vmatpush2.xpose.msra.mxu0 0.0
        %498 = vmatprep.subr.mxu0 0.0
        %499 = vmatpush2.xpose.msra.mxu0 0.0
        %500 = vmatprep.subr.mxu0 0.0
        %501 = vmatpush2.xpose.msra.mxu0 0.0
        %502 = vmatprep.subr.mxu0 0.0
        %503 = vmatpush2.xpose.msra.mxu0 0.0
        %504 = vmatprep.subr.mxu0 0.0
        %505 = vmatpush2.xpose.msra.mxu0 0.0
        %506 = vmatprep.subr.mxu0 0.0
        %507 = vmatpush2.xpose.msra.mxu0 0.0
        %508 = vmatprep.subr.mxu0 0.0
        %509 = vmatpush2.xpose.msra.mxu0 0.0
        %510 = vmatprep.subr.mxu0 0.0
        %511 = vmatpush2.xpose.msra.mxu0 0.0
        %512 = vmatprep.subr.mxu0 0.0
        %513 = vmatpush2.xpose.msra.mxu0 0.0
        %514 = vmatprep.subr.mxu0 0.0
        %515 = vmatpush2.xpose.msra.mxu0 0.0
        %516 = vmatprep.subr.mxu0 0.0
        %517 = vmatpush2.xpose.msra.mxu0 0.0
        %518 = vmatprep.subr.mxu0 0.0
        %519 = vmatpush2.xpose.msra.mxu0 0.0
        %520 = vmatprep.subr.mxu0 0.0
        %521 = vmatpush2.xpose.msra.mxu0 0.0
        %522 = vmatprep.subr.mxu0 0.0
        %523 = vmatpush2.xpose.msra.mxu0 0.0
        %524 = vmatprep.subr.mxu0 0.0
        %525 = vmatpush2.xpose.msra.mxu0 0.0
        %526 = vmatprep.mubr.f32.mxu0 0.0
        %527 = vmatmul.mubr.f32.gmra.mxu0 %v387
        %v528 = vpop.f32.mrf.mxu0
        %v529 = vadd.f32 0.0, %v528
        %v530 = vpop.f32.mrf.mxu0
        %531 = vdwg.mxu0
        %vm532 = vcmask 64512
        %533 = vst.msk [vmem:[%s253] sm:$0xff] %vm532, %v529
        %534 = vmatprep.subr.mxu0 0.0
        %535 = vmatpush1.xpose.msra.mxu0 0.0
        %536 = vmatprep.subr.mxu0 0.0
        %537 = vmatpush1.xpose.msra.mxu0 0.0
        %538 = vmatprep.subr.mxu0 0.0
        %539 = vmatpush1.xpose.msra.mxu0 0.0
        %540 = vmatprep.subr.mxu0 0.0
        %541 = vmatpush1.xpose.msra.mxu0 0.0
        %542 = vmatprep.subr.mxu0 0.0
        %543 = vmatpush1.xpose.msra.mxu0 0.0
        %544 = vmatprep.subr.mxu0 0.0
        %545 = vmatpush1.xpose.msra.mxu0 0.0
        %546 = vmatprep.subr.mxu0 0.0
        %547 = vmatpush1.xpose.msra.mxu0 0.0
        %548 = vmatprep.subr.mxu0 0.0
        %549 = vmatpush1.xpose.msra.mxu0 0.0
        %550 = vmatprep.subr.mxu0 0.0
        %551 = vmatpush1.xpose.msra.mxu0 0.0
        %552 = vmatprep.subr.mxu0 0.0
        %553 = vmatpush1.xpose.msra.mxu0 0.0
        %554 = vmatprep.subr.mxu0 0.0
        %555 = vmatpush1.xpose.msra.mxu0 0.0
        %556 = vmatprep.subr.mxu0 0.0
        %557 = vmatpush1.xpose.msra.mxu0 0.0
        %558 = vmatprep.subr.mxu0 0.0
        %559 = vmatpush1.xpose.msra.mxu0 0.0
        %560 = vmatprep.subr.mxu0 0.0
        %561 = vmatpush1.xpose.msra.mxu0 0.0
        %562 = vmatprep.subr.mxu0 0.0
        %563 = vmatpush1.xpose.msra.mxu0 0.0
        %564 = vmatprep.subr.mxu0 0.0
        %565 = vmatpush1.xpose.msra.mxu0 %v255
        %566 = vmatprep.subr.mxu0 0.0
        %567 = vmatpush2.xpose.msra.mxu0 0.0
        %568 = vmatprep.subr.mxu0 0.0
        %569 = vmatpush2.xpose.msra.mxu0 0.0
        %570 = vmatprep.subr.mxu0 0.0
        %571 = vmatpush2.xpose.msra.mxu0 0.0
        %572 = vmatprep.subr.mxu0 0.0
        %573 = vmatpush2.xpose.msra.mxu0 0.0
        %574 = vmatprep.subr.mxu0 0.0
        %575 = vmatpush2.xpose.msra.mxu0 0.0
        %576 = vmatprep.subr.mxu0 0.0
        %577 = vmatpush2.xpose.msra.mxu0 0.0
        %578 = vmatprep.subr.mxu0 0.0
        %579 = vmatpush2.xpose.msra.mxu0 0.0
        %580 = vmatprep.subr.mxu0 0.0
        %581 = vmatpush2.xpose.msra.mxu0 0.0
        %582 = vmatprep.subr.mxu0 0.0
        %583 = vmatpush2.xpose.msra.mxu0 0.0
        %584 = vmatprep.subr.mxu0 0.0
        %585 = vmatpush2.xpose.msra.mxu0 0.0
        %586 = vmatprep.subr.mxu0 0.0
        %587 = vmatpush2.xpose.msra.mxu0 0.0
        %588 = vmatprep.subr.mxu0 0.0
        %589 = vmatpush2.xpose.msra.mxu0 0.0
        %590 = vmatprep.subr.mxu0 0.0
        %591 = vmatpush2.xpose.msra.mxu0 0.0
        %592 = vmatprep.subr.mxu0 0.0
        %593 = vmatpush2.xpose.msra.mxu0 0.0
        %594 = vmatprep.subr.mxu0 0.0
        %595 = vmatpush2.xpose.msra.mxu0 0.0
        %596 = vmatprep.subr.mxu0 0.0
        %597 = vmatpush2.xpose.msra.mxu0 0.0
        %598 = vmatprep.mubr.f32.mxu0 0.0
        %599 = vmatmul.mubr.f32.gmra.mxu0 %v389
        %v600 = vpop.f32.mrf.mxu0
        %v601 = vadd.f32 0.0, %v600
        %v602 = vpop.f32.mrf.mxu0
        %603 = vdwg.mxu0
        %s604 = scalar_lea.vmem %s253, 8 [#allocation8]
        %605 = vst.msk [vmem:[%s604] sm:$0xff] %vm532, %v601
        %606 = vmatprep.subr.mxu0 0.0
        %607 = vmatpush1.xpose.msra.mxu0 0.0
        %608 = vmatprep.subr.mxu0 0.0
        %609 = vmatpush1.xpose.msra.mxu0 0.0
        %610 = vmatprep.subr.mxu0 0.0
        %611 = vmatpush1.xpose.msra.mxu0 0.0
        %612 = vmatprep.subr.mxu0 0.0
        %613 = vmatpush1.xpose.msra.mxu0 0.0
        %614 = vmatprep.subr.mxu0 0.0
        %615 = vmatpush1.xpose.msra.mxu0 0.0
        %616 = vmatprep.subr.mxu0 0.0
        %617 = vmatpush1.xpose.msra.mxu0 0.0
        %618 = vmatprep.subr.mxu0 0.0
        %619 = vmatpush1.xpose.msra.mxu0 0.0
        %620 = vmatprep.subr.mxu0 0.0
        %621 = vmatpush1.xpose.msra.mxu0 0.0
        %622 = vmatprep.subr.mxu0 0.0
        %623 = vmatpush1.xpose.msra.mxu0 0.0
        %624 = vmatprep.subr.mxu0 0.0
        %625 = vmatpush1.xpose.msra.mxu0 0.0
        %626 = vmatprep.subr.mxu0 0.0
        %627 = vmatpush1.xpose.msra.mxu0 0.0
        %628 = vmatprep.subr.mxu0 0.0
        %629 = vmatpush1.xpose.msra.mxu0 0.0
        %630 = vmatprep.subr.mxu0 0.0
        %631 = vmatpush1.xpose.msra.mxu0 0.0
        %632 = vmatprep.subr.mxu0 0.0
        %633 = vmatpush1.xpose.msra.mxu0 0.0
        %634 = vmatprep.subr.mxu0 0.0
        %635 = vmatpush1.xpose.msra.mxu0 0.0
        %636 = vmatprep.subr.mxu0 0.0
        %637 = vmatpush1.xpose.msra.mxu0 %v255
        %638 = vmatprep.subr.mxu0 0.0
        %639 = vmatpush2.xpose.msra.mxu0 0.0
        %640 = vmatprep.subr.mxu0 0.0
        %641 = vmatpush2.xpose.msra.mxu0 0.0
        %642 = vmatprep.subr.mxu0 0.0
        %643 = vmatpush2.xpose.msra.mxu0 0.0
        %644 = vmatprep.subr.mxu0 0.0
        %645 = vmatpush2.xpose.msra.mxu0 0.0
        %646 = vmatprep.subr.mxu0 0.0
        %647 = vmatpush2.xpose.msra.mxu0 0.0
        %648 = vmatprep.subr.mxu0 0.0
        %649 = vmatpush2.xpose.msra.mxu0 0.0
        %650 = vmatprep.subr.mxu0 0.0
        %651 = vmatpush2.xpose.msra.mxu0 0.0
        %652 = vmatprep.subr.mxu0 0.0
        %653 = vmatpush2.xpose.msra.mxu0 0.0
        %654 = vmatprep.subr.mxu0 0.0
        %655 = vmatpush2.xpose.msra.mxu0 0.0
        %656 = vmatprep.subr.mxu0 0.0
        %657 = vmatpush2.xpose.msra.mxu0 0.0
        %658 = vmatprep.subr.mxu0 0.0
        %659 = vmatpush2.xpose.msra.mxu0 0.0
        %660 = vmatprep.subr.mxu0 0.0
        %661 = vmatpush2.xpose.msra.mxu0 0.0
        %662 = vmatprep.subr.mxu0 0.0
        %663 = vmatpush2.xpose.msra.mxu0 0.0
        %664 = vmatprep.subr.mxu0 0.0
        %665 = vmatpush2.xpose.msra.mxu0 0.0
        %666 = vmatprep.subr.mxu0 0.0
        %667 = vmatpush2.xpose.msra.mxu0 0.0
        %668 = vmatprep.subr.mxu0 0.0
        %669 = vmatpush2.xpose.msra.mxu0 0.0
        %670 = vmatprep.mubr.f32.mxu0 0.0
        %671 = vmatmul.mubr.f32.gmra.mxu0 %v458
        %v672 = vpop.f32.mrf.mxu0
        %v673 = vadd.f32 0.0, %v672
        %v674 = vpop.f32.mrf.mxu0
        %675 = vdwg.mxu0
        %s676 = scalar_lea.vmem %s253, 16 [#allocation8]
        %677 = vst.msk [vmem:[%s676] sm:$0xff] %vm532, %v673
        %678 = vmatprep.subr.mxu0 0.0
        %679 = vmatpush1.xpose.msra.mxu0 0.0
        %680 = vmatprep.subr.mxu0 0.0
        %681 = vmatpush1.xpose.msra.mxu0 0.0
        %682 = vmatprep.subr.mxu0 0.0
        %683 = vmatpush1.xpose.msra.mxu0 0.0
        %684 = vmatprep.subr.mxu0 0.0
        %685 = vmatpush1.xpose.msra.mxu0 0.0
        %686 = vmatprep.subr.mxu0 0.0
        %687 = vmatpush1.xpose.msra.mxu0 0.0
        %688 = vmatprep.subr.mxu0 0.0
        %689 = vmatpush1.xpose.msra.mxu0 0.0
        %690 = vmatprep.subr.mxu0 0.0
        %691 = vmatpush1.xpose.msra.mxu0 0.0
        %692 = vmatprep.subr.mxu0 0.0
        %693 = vmatpush1.xpose.msra.mxu0 0.0
        %694 = vmatprep.subr.mxu0 0.0
        %695 = vmatpush1.xpose.msra.mxu0 0.0
        %696 = vmatprep.subr.mxu0 0.0
        %697 = vmatpush1.xpose.msra.mxu0 0.0
        %698 = vmatprep.subr.mxu0 0.0
        %699 = vmatpush1.xpose.msra.mxu0 0.0
        %700 = vmatprep.subr.mxu0 0.0
        %701 = vmatpush1.xpose.msra.mxu0 0.0
        %702 = vmatprep.subr.mxu0 0.0
        %703 = vmatpush1.xpose.msra.mxu0 0.0
        %704 = vmatprep.subr.mxu0 0.0
        %705 = vmatpush1.xpose.msra.mxu0 0.0
        %706 = vmatprep.subr.mxu0 0.0
        %707 = vmatpush1.xpose.msra.mxu0 0.0
        %708 = vmatprep.subr.mxu0 0.0
        %709 = vmatpush1.xpose.msra.mxu0 %v255
        %710 = vmatprep.subr.mxu0 0.0
        %711 = vmatpush2.xpose.msra.mxu0 0.0
        %712 = vmatprep.subr.mxu0 0.0
        %713 = vmatpush2.xpose.msra.mxu0 0.0
        %714 = vmatprep.subr.mxu0 0.0
        %715 = vmatpush2.xpose.msra.mxu0 0.0
        %716 = vmatprep.subr.mxu0 0.0
        %717 = vmatpush2.xpose.msra.mxu0 0.0
        %718 = vmatprep.subr.mxu0 0.0
        %719 = vmatpush2.xpose.msra.mxu0 0.0
        %720 = vmatprep.subr.mxu0 0.0
        %721 = vmatpush2.xpose.msra.mxu0 0.0
        %722 = vmatprep.subr.mxu0 0.0
        %723 = vmatpush2.xpose.msra.mxu0 0.0
        %724 = vmatprep.subr.mxu0 0.0
        %725 = vmatpush2.xpose.msra.mxu0 0.0
        %726 = vmatprep.subr.mxu0 0.0
        %727 = vmatpush2.xpose.msra.mxu0 0.0
        %728 = vmatprep.subr.mxu0 0.0
        %729 = vmatpush2.xpose.msra.mxu0 0.0
        %730 = vmatprep.subr.mxu0 0.0
        %731 = vmatpush2.xpose.msra.mxu0 0.0
        %732 = vmatprep.subr.mxu0 0.0
        %733 = vmatpush2.xpose.msra.mxu0 0.0
        %734 = vmatprep.subr.mxu0 0.0
        %735 = vmatpush2.xpose.msra.mxu0 0.0
        %736 = vmatprep.subr.mxu0 0.0
        %737 = vmatpush2.xpose.msra.mxu0 0.0
        %738 = vmatprep.subr.mxu0 0.0
        %739 = vmatpush2.xpose.msra.mxu0 0.0
        %740 = vmatprep.subr.mxu0 0.0
        %741 = vmatpush2.xpose.msra.mxu0 0.0
        %742 = vmatprep.mubr.f32.mxu0 0.0
        %743 = vmatmul.mubr.f32.gmra.mxu0 %v460
        %v744 = vpop.f32.mrf.mxu0
        %v745 = vadd.f32 0.0, %v744
        %v746 = vpop.f32.mrf.mxu0
        %747 = vdwg.mxu0
        %s748 = scalar_lea.vmem %s253, 24 [#allocation8]
        %749 = vst.msk [vmem:[%s748] sm:$0xff] %vm532, %v745
        %s750 = sand.u32 %s120, 1
        %s751 = scalar_lea.sflag [#allocation4], %s750
        %s752 = sand.u32 %s120, 1
        %s753 = smul.addr %s752, 32
        %s754 = scalar_lea.vmem [#allocation8], %s753
        // Predicated region
        $region45: #{tpu_custom_call.1} parent=31 // pred_check
          %p755 = pneg %p130
        $region46: #{tpu_custom_call.1} parent=31 // pred_check_branch
          %757 = sbr.rel (%p755) target = $region48
        $region47: #{tpu_custom_call.1} parent=31 // pred_region
          %s759 = ssub.s32 512, 512
          %760 = vsyncadd %s751, %s759
          %s761 = smul.addr %s27, 4
          %s762 = sadd.s32 %s28, %s761
          %s763 = smul.addr %s762, 128
          %s764 = scalar_lea.hbm %s3, %s763
          %s765 = sshll.u32 %s754, 4
          %s766 = int_to_ptr.vmem [resolvable:$true] %s765
          %771 = dma.vmem_to_hbm [thread:$0]  %s766, 512, %s764, %s751, 128, 128, 8
        $region48: #{tpu_custom_call.1} parent=31 // pred_fallthru
          _
      $region32: #{tpu_custom_call.1} parent=5 // pred_fallthru
        _
      %p772 = scmp.le.s32.totalorder 2, %s18
      // Predicated region
      $region49: #{tpu_custom_call.1} parent=5 // pred_check
        %p773 = pneg %p772
      $region50: #{tpu_custom_call.1} parent=5 // pred_check_branch
        %775 = sbr.rel (%p773) target = $region52
      $region51: #{tpu_custom_call.1} parent=5 // pred_region
        %s776 = ssub.s32 %s18, 2
        // Predicated region
        $region53: #{tpu_custom_call.1} parent=51 // pred_check
          %p777 = pneg %p136
        $region54: #{tpu_custom_call.1} parent=51 // pred_check_branch
          %779 = sbr.rel (%p777) target = $region56
        $region55: #{tpu_custom_call.1} parent=51 // pred_region
          %s780 = sand.u32 %s121, 1
          %s781 = scalar_lea.sflag [#allocation4], %s780
          %s782 = sand.u32 %s121, 1
          %s783 = smul.addr %s782, 32
          %s784 = scalar_lea.vmem [#allocation8], %s783
          %785 = dma.done %s781, 512
        $region56: #{tpu_custom_call.1} parent=51 // pred_fallthru
          _
      $region52: #{tpu_custom_call.1} parent=5 // pred_fallthru
        _
    $region6: #{tpu_custom_call.1} parent=1 // loop_footer
      %s22 = sadd.s32 1, %s18
    $region7: #{tpu_custom_call.1} parent=1 // loop_footer_branch
      %17 = sbr.rel target = $region3
    $region8: #{tpu_custom_call.1} parent=1 // loop_exit
      _
    %786 = vsyncpa [#allocation3], 1
    %s787 = scalar_lea.sflag [#allocation3], 1
    %788 = vsyncpa %s787, 1
    %789 = vsyncpa [#allocation6], 1
    %s790 = scalar_lea.sflag [#allocation6], 1
    %791 = vsyncpa %s790, 1
    %792 = vsyncpa [#allocation4], 1
    %s793 = scalar_lea.sflag [#allocation4], 1
    %794 = vsyncpa %s793, 1

</llo_original>
